<compile_context>
chip_gen: v6e
topology: v6e:2x2x1
jax: 0.10.0
libtpu: 0.0.40
codegen_flags: <defaults>
</compile_context>

<pallas_src>
import functools

import jax
import jax.numpy as jnp
import numpy as np
from jax import lax
from jax.experimental import pallas as pl
from jax.experimental.pallas import tpu as pltpu


_LANE = 128
_SUBLANE = 8


def _round_up(x, m):
    return (x + m - 1) // m * m


def _cdiv(a, b):
    return (a + b - 1) // b


@functools.lru_cache(maxsize=None)
def _vmem_budget_and_limit():
    """Per-generation VMEM budget for the auto-pipelined blocks + scoped limit."""
    cap = 64 * 1024 * 1024  # conservative default (v7x per-TC VMEM)
    try:
        cap = int(pltpu.get_tpu_info().vmem_capacity_bytes)
    except Exception:
        pass
    budget = (cap * 5) // 8            # ~80 MiB on v5e/v6e (128), ~40 MiB on v7x (64)
    limit = min(cap - (8 << 20), budget + (16 << 20))
    limit = max(limit, budget + (4 << 20))
    return budget, limit


@functools.lru_cache(maxsize=None)
def _num_tensorcores():
    """TensorCores per device (2 on v7x-style megacore parts, else 1)."""
    try:
        dev = jax.devices()[0]
    except Exception:
        return 1
    for attr in ("num_cores", "core_count"):
        try:
            v = int(getattr(dev, attr))
            if v > 0:
                return v
        except Exception:
            continue
    return 1


def _block_spec(shape, index_map, *, buffers=None):
    """BlockSpec, optionally single/N-buffered (resident weights use buffers=1)."""
    if buffers is not None and hasattr(pl, "Buffered"):
        try:
            return pl.BlockSpec(shape, index_map, pipeline_mode=pl.Buffered(buffers))
        except TypeError:
            pass
    return pl.BlockSpec(shape, index_map)


# ----------------------------------------------------------------------------
# Parameter preparation (hoisted out of the per-call path)
# ----------------------------------------------------------------------------
def prepare_mapping_params(w, b, *, param_dtype=jnp.bfloat16):
    """Pad nn.Linear params once at load time.

    w: [H, D] (pre-transposed), b: [D].  Weight is stored bf16 [H, Dp] (D
    lane-padded to 128, zero columns); bias f32 [1, Dp].  Zero pad columns give
    zero outputs that are sliced off after the kernel.
    """
    H, D = w.shape
    Dp = _round_up(D, _LANE)
    w_p = jnp.zeros((H, Dp), param_dtype).at[:, :D].set(w.astype(param_dtype))
    b_p = jnp.zeros((1, Dp), jnp.float32).at[0, :D].set(b.astype(jnp.float32))
    return w_p, b_p, D


# ----------------------------------------------------------------------------
# Pallas kernels
# ----------------------------------------------------------------------------
def _maxpool_linear_kernel(h_ref, w_ref, b_ref, o_ref, pooled_ref, *,
                           seq_len, seq_block, mask_seq):
    # h_ref: (tb, ts, H) activation dtype   w_ref: (H, Dp) bf16
    # b_ref: (1, Dp) f32                    o_ref: (tb, Dp) activation dtype
    # pooled_ref: VMEM scratch (tb, H), activation dtype — running max over seq.
    s = pl.program_id(1)

    @pl.when(s == 0)
    def _():
        pooled_ref[...] = jnp.full_like(pooled_ref, -jnp.inf)

    h = h_ref[...]
    if mask_seq:
        # Ragged last seq block: out-of-range rows (undefined partial-block
        # data) are pushed to -inf so they never win the max.  This replaces
        # the old host-side -inf jnp.pad of the whole [B,S,H] activation.
        idx = lax.broadcasted_iota(jnp.int32, (seq_block, 1), 0) + s * seq_block
        h = jnp.where((idx < seq_len)[None, :, :], h,
                      jnp.asarray(-jnp.inf, dtype=h.dtype))
    # Running max in the activation dtype (max is exact in bf16) — no upcast.
    pooled_ref[...] = jnp.maximum(pooled_ref[...], jnp.max(h, axis=1))

    @pl.when(s == pl.num_programs(1) - 1)
    def _():
        # bf16 x bf16 MXU matmul with f32 accumulation; bias added in f32.
        acc = jnp.dot(pooled_ref[...].astype(w_ref.dtype), w_ref[...],
                      preferred_element_type=jnp.float32)
        o_ref[...] = (acc + b_ref[...]).astype(o_ref.dtype)


def _cls_linear_kernel(p_ref, w_ref, b_ref, o_ref):
    # p_ref: (tb, H)  w_ref: (H, Dp) bf16  b_ref: (1, Dp) f32  o_ref: (tb, Dp)
    acc = jnp.dot(p_ref[...].astype(w_ref.dtype), w_ref[...],
                  preferred_element_type=jnp.float32)
    o_ref[...] = (acc + b_ref[...]).astype(o_ref.dtype)


# ----------------------------------------------------------------------------
# Wrappers (tiling + pallas_call plumbing; no activation padding in HBM)
# ----------------------------------------------------------------------------
def maxpool_mapping(hidden_state, params, *, max_seq_block=None):
    """mode == 'maxpooling': Linear(max(hidden_state, dim=1))."""
    w_p, b_p, D = params
    B, S, H = hidden_state.shape
    Dp = w_p.shape[1]
    in_bytes = hidden_state.dtype.itemsize
    out_dtype = hidden_state.dtype
    out_bytes = jnp.dtype(out_dtype).itemsize

    budget, vmem_limit = _vmem_budget_and_limit()
    n_cores = _num_tensorcores()

    b_up = _round_up(B, _SUBLANE)
    s_up = _round_up(S, _SUBLANE)

    # Resident single-buffered weight + small bias; everything else per row.
    fixed = w_p.size * w_p.dtype.itemsize + 2 * b_p.size * 4
    avail = max(budget - fixed, 1 << 20)
    row_fixed = H * in_bytes + 2 * Dp * out_bytes      # pooled scratch + out blk

    def max_tb(ts):
        per_row = 2 * ts * H * in_bytes + row_fixed    # double-buffered h block
        return (avail // per_row) // _SUBLANE * _SUBLANE

    # Prefer a single full-sequence tile (fewest grid steps, zero seq padding);
    # chunk the sequence only if that forces the batch tile below one sublane.
    ts = s_up
    if max_tb(ts) < _SUBLANE:
        ts_cap = max(_SUBLANE,
                     ((avail // _SUBLANE - row_fixed) // (2 * H * in_bytes))
                     // _SUBLANE * _SUBLANE)
        n_s = _cdiv(s_up, ts_cap)
        ts = _round_up(_cdiv(S, n_s), _SUBLANE)        # balanced: minimal padding
    if max_seq_block is not None and ts > max_seq_block:
        n_s = _cdiv(S, max_seq_block)
        ts = _round_up(_cdiv(S, n_s), _SUBLANE)
    ts = min(ts, s_up)

    tb = max(min(max_tb(ts), b_up), _SUBLANE)
    n_b = _cdiv(b_up, tb)
    # Split the batch only on multi-TensorCore parts (v7x); on 1-TC parts one
    # maximal tile minimizes per-step pipeline overhead.
    if n_cores >= 2 and n_b < n_cores and B >= n_cores * _SUBLANE:
        n_b = n_cores
    tb = _round_up(_cdiv(B, n_b), _SUBLANE)            # balanced batch tile
    # TODO(synk): for v7x with a single batch tile, a parallel hidden-dim grid
    # axis would let both TensorCores share the [B,S,H] read — not implemented.

    grid = (_cdiv(B, tb), _cdiv(S, ts))                # reduction (seq) axis last
    mask_seq = (S % ts) != 0

    kernel = functools.partial(_maxpool_linear_kernel,
                               seq_len=S, seq_block=ts, mask_seq=mask_seq)

    out = pl.pallas_call(
        kernel,
        out_shape=jax.ShapeDtypeStruct((B, Dp), out_dtype),
        grid_spec=pltpu.PrefetchScalarGridSpec(
            num_scalar_prefetch=0,
            grid=grid,
            in_specs=[
                pl.BlockSpec((tb, ts, H), lambda i, s: (i, s, 0)),
                _block_spec((H, Dp), lambda i, s: (0, 0), buffers=1),  # resident W
                _block_spec((1, Dp), lambda i, s: (0, 0), buffers=1),  # resident b
            ],
            out_specs=pl.BlockSpec((tb, Dp), lambda i, s: (i, 0)),
            scratch_shapes=[pltpu.VMEM((tb, H), hidden_state.dtype)],
        ),
        compiler_params=pltpu.CompilerParams(
            dimension_semantics=("parallel", "arbitrary"),
            vmem_limit_bytes=vmem_limit,
        ),
        cost_estimate=pl.CostEstimate(
            flops=2 * B * H * Dp + B * S * H,
            transcendentals=0,
            bytes_accessed=(B * S * H * in_bytes
                            + H * Dp * w_p.dtype.itemsize
                            + B * Dp * out_bytes),
        ),
    )(hidden_state, w_p, b_p)
    return out[:, :D]


def cls_mapping(pooler_output, params):
    """mode == 'cls': Linear(pooler_output)."""
    w_p, b_p, D = params
    B, H = pooler_output.shape
    Dp = w_p.shape[1]
    in_bytes = pooler_output.dtype.itemsize
    out_dtype = pooler_output.dtype
    out_bytes = jnp.dtype(out_dtype).itemsize

    budget, vmem_limit = _vmem_budget_and_limit()
    n_cores = _num_tensorcores()

    b_up = _round_up(B, _SUBLANE)
    fixed = w_p.size * w_p.dtype.itemsize + 2 * b_p.size * 4
    avail = max(budget - fixed, 1 << 20)
    per_row = 2 * H * in_bytes + 2 * Dp * out_bytes
    tb = min(max(_SUBLANE, (avail // per_row) // _SUBLANE * _SUBLANE), b_up)
    n_b = _cdiv(b_up, tb)
    if n_cores >= 2 and n_b < n_cores and B >= n_cores * _SUBLANE:
        n_b = n_cores
    tb = _round_up(_cdiv(B, n_b), _SUBLANE)

    out = pl.pallas_call(
        _cls_linear_kernel,
        out_shape=jax.ShapeDtypeStruct((B, Dp), out_dtype),
        grid_spec=pltpu.PrefetchScalarGridSpec(
            num_scalar_prefetch=0,
            grid=(_cdiv(B, tb),),
            in_specs=[
                pl.BlockSpec((tb, H), lambda i: (i, 0)),
                _block_spec((H, Dp), lambda i: (0, 0), buffers=1),
                _block_spec((1, Dp), lambda i: (0, 0), buffers=1),
            ],
            out_specs=pl.BlockSpec((tb, Dp), lambda i: (i, 0)),
        ),
        compiler_params=pltpu.CompilerParams(
            dimension_semantics=("parallel",),
            vmem_limit_bytes=vmem_limit,
        ),
        cost_estimate=pl.CostEstimate(
            flops=2 * B * H * Dp,
            transcendentals=0,
            bytes_accessed=(B * H * in_bytes
                            + H * Dp * w_p.dtype.itemsize
                            + B * Dp * out_bytes),
        ),
    )(pooler_output, w_p, b_p)
    return out[:, :D]


def utterance_encoder_forward(hidden_state, pooler_output, params, mode):
    """Mirrors UtteranceEncoder.forward after the pretrained encoder call.

    # TODO(synk): ragged padding / pad_sequence of variable-length utterances
    # (the list-of-tensors branch) is host-side glue over the same compute
    # path — not a Pallas op.
    # TODO(synk): max-pooling runs over all S positions (incl. padding tokens),
    # exactly as the PyTorch module does; mask-aware pooling would reuse the
    # in-kernel -inf masking hook with the attention mask.
    """
    if mode == "cls":
        return cls_mapping(pooler_output, params)
    elif mode == "maxpooling":
        return maxpool_mapping(hidden_state, params)
    else:
        raise AssertionError("not support other operation")


# ----------------------------------------------------------------------------
# Main
# ----------------------------------------------------------------------------
if __name__ == "__main__":
    # Small, module-consistent shapes; B and S are deliberately NOT multiples of
    # the tile sizes so the partial-block / in-kernel-mask paths are exercised.
    B, S, H, D = 6, 20, 32, 16

    key = jax.random.PRNGKey(0)
    k_h, k_p, k_w, k_b = jax.random.split(key, 4)

    # Synthetic encoder outputs in bf16 (native transformer output dtype).
    hidden_state = jax.random.normal(k_h, (B, S, H), dtype=jnp.float32).astype(jnp.bfloat16)
    pooler_output = jnp.tanh(
        jax.random.normal(k_p, (B, H), dtype=jnp.float32)).astype(jnp.bfloat16)

    # nn.Linear(hidden_dim, out_dim) params, PyTorch-style uniform init,
    # deterministic.  Stored pre-transposed as [H, D] for the kernel matmul.
    bound = 1.0 / np.sqrt(H)
    w = jax.random.uniform(k_w, (H, D), jnp.float32, -bound, bound)
    b = jax.random.uniform(k_b, (D,), jnp.float32, -bound, bound)

    # Pad/cast params once (hoisted out of the per-call path).
    params = prepare_mapping_params(w, b)

    # f32 reference using the same bf16-quantized weights the kernel uses.
    w_used = np.asarray(params[0][:, :D].astype(jnp.float32))
    b_used = np.asarray(b, dtype=np.float32)
    h_f32 = np.asarray(hidden_state.astype(jnp.float32))
    p_f32 = np.asarray(pooler_output.astype(jnp.float32))

    # maxpooling mode — default tiling (single seq step, ragged seq masked)
    out_max = jax.block_until_ready(
        utterance_encoder_forward(hidden_state, pooler_output, params, "maxpooling"))
    ref_max = h_f32.max(axis=1) @ w_used + b_used
    np.testing.assert_allclose(np.asarray(out_max.astype(jnp.float32)), ref_max,
                               rtol=2e-2, atol=2e-2)

    # maxpooling mode — forced multi-step seq reduction (exercises the running
    # max accumulator across grid steps + ragged last seq block mask)
    out_max2 = jax.block_until_ready(maxpool_mapping(hidden_state, params, max_seq_block=8))
    np.testing.assert_allclose(np.asarray(out_max2.astype(jnp.float32)), ref_max,
                               rtol=2e-2, atol=2e-2)

    # cls mode
    out_cls = jax.block_until_ready(
        utterance_encoder_forward(hidden_state, pooler_output, params, "cls"))
    ref_cls = p_f32 @ w_used + b_used
    np.testing.assert_allclose(np.asarray(out_cls.astype(jnp.float32)), ref_cls,
                               rtol=2e-2, atol=2e-2)

    print("KERNEL_OK")
</pallas_src>

<mosaic_0001>
module attributes {stable_mosaic.version = 11 : i64} {
  func.func @_maxpool_linear_kernel(%arg0: i32, %arg1: i32, %arg2: memref<8x24x32xbf16, #tpu.memory_space<vmem>>, %arg3: memref<32x128xbf16, #tpu.memory_space<vmem>>, %arg4: memref<1x128xf32, #tpu.memory_space<vmem>>, %arg5: memref<8x128xbf16, #tpu.memory_space<vmem>>, %arg6: memref<8x32xbf16, #tpu.memory_space<vmem>>) attributes {dimension_semantics = [#tpu.dimension_semantics<parallel>, #tpu.dimension_semantics<arbitrary>], iteration_bounds = array<i64: 1, 1>, scalar_prefetch = 0 : i64, scratch_operands = 1 : i64, tpu.core_type = #tpu.core_type<tc>, window_params = [{transform_indices = @transform_0, window_bounds = array<i64: 8, 24, 32>}, {pipeline_mode = #tpu.pipeline_mode<synchronous>, transform_indices = @transform_1, window_bounds = array<i64: 32, 128>}, {pipeline_mode = #tpu.pipeline_mode<synchronous>, transform_indices = @transform_2, window_bounds = array<i64: 1, 128>}, {transform_indices = @transform_3, window_bounds = array<i64: 8, 128>}]} {
    %c0_i32 = arith.constant 0 : i32
    %0 = arith.cmpi eq, %arg1, %c0_i32 : i32
    %1 = arith.extui %0 : i1 to i32
    %c0_i32_0 = arith.constant 0 : i32
    %2 = arith.cmpi ne, %1, %c0_i32_0 : i32
    scf.if %2 {
      %cst_10 = arith.constant 0xFF80 : bf16
      %22 = vector.broadcast %cst_10 : bf16 to vector<8x32xbf16>
      %c0_11 = arith.constant 0 : index
      %c0_12 = arith.constant 0 : index
      %23 = vector.load %arg6[%c0_11, %c0_12] : memref<8x32xbf16, #tpu.memory_space<vmem>>, vector<8x32xbf16>
      tpu.vector_store %arg6[%c0_11, %c0_12], %22 {strides = array<i32>} : memref<8x32xbf16, #tpu.memory_space<vmem>>, vector<8x32xbf16>,
    } else {
    }
    %c0 = arith.constant 0 : index
    %c0_1 = arith.constant 0 : index
    %c0_2 = arith.constant 0 : index
    %3 = vector.load %arg2[%c0, %c0_1, %c0_2] : memref<8x24x32xbf16, #tpu.memory_space<vmem>>, vector<8x24x32xbf16>
    %4 = tpu.iota {dimensions = array<i32: 0>} : vector<24x1xi32>
    %c24_i32 = arith.constant 24 : i32
    %5 = arith.muli %arg1, %c24_i32 : i32
    %6 = vector.broadcast %5 : i32 to vector<24x1xi32>
    %7 = arith.addi %4, %6 : vector<24x1xi32>
    %c20_i32 = arith.constant 20 : i32
    %8 = vector.broadcast %c20_i32 : i32 to vector<24x1xi32>
    %9 = arith.cmpi slt, %7, %8 : vector<24x1xi32>
    %10 = vector.shape_cast %9 : vector<24x1xi1> to vector<1x24x1xi1>
    %cst = arith.constant 0xFF80 : bf16
    %11 = vector.shape_cast %10 : vector<1x24x1xi1> to vector<1x24x1xi1>
    %12 = vector.broadcast %11 : vector<1x24x1xi1> to vector<8x24x32xi1>
    %13 = vector.broadcast %cst : bf16 to vector<8x24x32xbf16>
    %14 = arith.select %12, %3, %13 : vector<8x24x32xi1>, vector<8x24x32xbf16>
    %c0_3 = arith.constant 0 : index
    %c0_4 = arith.constant 0 : index
    %15 = vector.load %arg6[%c0_3, %c0_4] : memref<8x32xbf16, #tpu.memory_space<vmem>>, vector<8x32xbf16>
    %cst_5 = arith.constant dense<0xFF80> : vector<8x32xbf16>
    %16 = vector.multi_reduction <maximumf>, %14, %cst_5 [1] : vector<8x24x32xbf16> to vector<8x32xbf16>
    %17 = arith.maximumf %15, %16 : vector<8x32xbf16>
    %c0_6 = arith.constant 0 : index
    %c0_7 = arith.constant 0 : index
    %18 = vector.load %arg6[%c0_6, %c0_7] : memref<8x32xbf16, #tpu.memory_space<vmem>>, vector<8x32xbf16>
    tpu.vector_store %arg6[%c0_6, %c0_7], %17 {strides = array<i32>} : memref<8x32xbf16, #tpu.memory_space<vmem>>, vector<8x32xbf16>,
    %c0_i32_8 = arith.constant 0 : i32
    %19 = arith.cmpi eq, %arg1, %c0_i32_8 : i32
    %20 = arith.extui %19 : i1 to i32
    %c0_i32_9 = arith.constant 0 : i32
    %21 = arith.cmpi ne, %20, %c0_i32_9 : i32
    scf.if %21 {
      %c0_10 = arith.constant 0 : index
      %c0_11 = arith.constant 0 : index
      %22 = vector.load %arg6[%c0_10, %c0_11] : memref<8x32xbf16, #tpu.memory_space<vmem>>, vector<8x32xbf16>
      %c0_12 = arith.constant 0 : index
      %c0_13 = arith.constant 0 : index
      %23 = vector.load %arg3[%c0_12, %c0_13] : memref<32x128xbf16, #tpu.memory_space<vmem>>, vector<32x128xbf16>
      %cst_14 = arith.constant dense<0.000000e+00> : vector<8x128xf32>
      %24 = tpu.matmul %22, %23, %cst_14 {dimension_numbers = #tpu.dot_dimension_numbers<[1], [0], [0], [1], [0, 0, 1, 1], [], []>} : vector<8x32xbf16>, vector<32x128xbf16>, vector<8x128xf32> -> vector<8x128xf32>
      %c0_15 = arith.constant 0 : index
      %c0_16 = arith.constant 0 : index
      %25 = vector.load %arg4[%c0_15, %c0_16] : memref<1x128xf32, #tpu.memory_space<vmem>>, vector<1x128xf32>
      %26 = vector.broadcast %25 : vector<1x128xf32> to vector<8x128xf32>
      %27 = arith.addf %24, %26 : vector<8x128xf32>
      %28 = arith.truncf %27 : vector<8x128xf32> to vector<8x128xbf16>
      %c0_17 = arith.constant 0 : index
      %c0_18 = arith.constant 0 : index
      %29 = vector.load %arg5[%c0_17, %c0_18] : memref<8x128xbf16, #tpu.memory_space<vmem>>, vector<8x128xbf16>
      tpu.vector_store %arg5[%c0_17, %c0_18], %28 {strides = array<i32>} : memref<8x128xbf16, #tpu.memory_space<vmem>>, vector<8x128xbf16>,
    } else {
    }
    return
  }
  func.func @transform_0(%arg0: i32, %arg1: i32) -> (i32, i32, i32) {
    %c0_i32 = arith.constant 0 : i32
    %c0_i32_0 = arith.constant 0 : i32
    return %arg0, %arg1, %c0_i32 : i32, i32, i32
  }
  func.func @transform_1(%arg0: i32, %arg1: i32) -> (i32, i32) {
    %c0_i32 = arith.constant 0 : i32
    %c0_i32_0 = arith.constant 0 : i32
    %c0_i32_1 = arith.constant 0 : i32
    return %c0_i32, %c0_i32_0 : i32, i32
  }
  func.func @transform_2(%arg0: i32, %arg1: i32) -> (i32, i32) {
    %c0_i32 = arith.constant 0 : i32
    %c0_i32_0 = arith.constant 0 : i32
    %c0_i32_1 = arith.constant 0 : i32
    return %c0_i32, %c0_i32_0 : i32, i32
  }
  func.func @transform_3(%arg0: i32, %arg1: i32) -> (i32, i32) {
    %c0_i32 = arith.constant 0 : i32
    %c0_i32_0 = arith.constant 0 : i32
    return %arg0, %c0_i32 : i32, i32
  }
}

</mosaic_0001>

<llo_original>
// kernel: tpu_custom_call.1
$region0: #{tpu_custom_call.1}
  #allocation0 [shape = 'u32[]', space=smem, size = 0x4, offset = 0x4, fixed_abs, tag = 'smem constant byte address 0x4 - core index']
  #allocation1 [shape = 'u32[144,128]{1,0:T(1,128)}', space=vmem, size = 0x12000, scoped, tag = 'internal scratch']
  #allocation2 [shape = 'bf16[8,32]{1,0:T(8,128)(2,1)}', space=vmem, size = 0x800, scoped, tag = 'scratch operand']
  %s0 = inlined_call_operand.hbm [shape: bf16[6,20,32], index: 0, kind: input, shape index: {}]
  %s1 = inlined_call_operand.hbm [shape: bf16[32,128], index: 1, kind: input, shape index: {}]
  %s2 = inlined_call_operand.vmem [shape: f32[1,128], index: 2, kind: input, shape index: {}]
  %s3 = inlined_call_operand.hbm [shape: bf16[6,128], index: 3, kind: output, shape index: {}]
  %s4 = sld [smem:[#allocation0]]
  $region38: #{tpu_custom_call.1} parent=0
    _
  %s6 = ssub.s32 1, %s4
  %s7 = scalar_select 0, %s6, %s4
  $region1: #{tpu_custom_call.1} parent=0
    #allocation3 [shape = 'u8[49152]{0}', space=vmem, size = 0xc000, scoped, tag = 'input window, operand 0, single buffered']
    #allocation4 [shape = 's32[1]{0}', space=sflag, size = 0x4, scoped, tag = 'scoped memory for tpu_custom_call.1']
    #allocation5 [shape = 's32[1]{0}', space=sflag, size = 0x4, scoped, tag = 'scoped memory for tpu_custom_call.1']
    #allocation6 [shape = 'u8[8192]{0}', space=vmem, size = 0x2000, scoped, tag = 'input window, operand 1, single buffered']
    #allocation7 [shape = 's32[1]{0}', space=sflag, size = 0x4, scoped, tag = 'scoped memory for tpu_custom_call.1']
    #allocation8 [shape = 'u8[2048]{0}', space=vmem, size = 0x800, scoped, tag = 'output window, operand 0, single buffered']
    %8 = vsyncpa [#allocation4], 0
    %9 = vsyncpa [#allocation7], 0
    %10 = vsyncpa [#allocation5], 0
    // Predicated region
    $region2: #{tpu_custom_call.1} parent=1 // pred_check
      _
    $region3: #{tpu_custom_call.1} parent=1 // pred_check_branch
      %12 = sbr.rel (0) target = $region5
    $region4: #{tpu_custom_call.1} parent=1 // pred_region
      %s14 = ssub.s32 1536, 1152
      %15 = vsyncadd [#allocation4], %s14
      %s16 = sshll.u32 [#allocation3], 4
      %s17 = int_to_ptr.vmem [resolvable:$true] %s16
      %22 = dma.hbm_to_vmem [thread:$0]  %s0, 1152, %s17, [#allocation4], 64, 64, 4
    $region5: #{tpu_custom_call.1} parent=1 // pred_fallthru
      _
    // Predicated region
    $region6: #{tpu_custom_call.1} parent=1 // pred_check
      _
    $region7: #{tpu_custom_call.1} parent=1 // pred_check_branch
      %24 = sbr.rel (0) target = $region9
    $region8: #{tpu_custom_call.1} parent=1 // pred_region
      %s26 = ssub.s32 256, 256
      %27 = vsyncadd [#allocation7], %s26
      %s28 = sshll.u32 [#allocation6], 4
      %s29 = int_to_ptr.vmem [resolvable:$true] %s28
      %34 = dma.hbm_to_vmem [thread:$0]  %s1, 256, %s29, [#allocation7], 64, 64, 4
    $region9: #{tpu_custom_call.1} parent=1 // pred_fallthru
      _
    // Predicated region
    $region10: #{tpu_custom_call.1} parent=1 // pred_check
      _
    $region11: #{tpu_custom_call.1} parent=1 // pred_check_branch
      %36 = sbr.rel (0) target = $region13
    $region12: #{tpu_custom_call.1} parent=1 // pred_region
      _
    $region13: #{tpu_custom_call.1} parent=1 // pred_fallthru
      _
    // Predicated region
    $region14: #{tpu_custom_call.1} parent=1 // pred_check
      _
    $region15: #{tpu_custom_call.1} parent=1 // pred_check_branch
      %38 = sbr.rel (0) target = $region17
    $region16: #{tpu_custom_call.1} parent=1 // pred_region
      %39 = dma.done [#allocation4], 1536
    $region17: #{tpu_custom_call.1} parent=1 // pred_fallthru
      _
    // Predicated region
    $region18: #{tpu_custom_call.1} parent=1 // pred_check
      _
    $region19: #{tpu_custom_call.1} parent=1 // pred_check_branch
      %41 = sbr.rel (0) target = $region21
    $region20: #{tpu_custom_call.1} parent=1 // pred_region
      %42 = dma.done [#allocation7], 256
    $region21: #{tpu_custom_call.1} parent=1 // pred_fallthru
      _
    %p45 = scmp.eq.s32.totalorder 0, 0
    // Predicated region
    $region22: #{tpu_custom_call.1} parent=1 // pred_check
      %p46 = pneg %p45
    $region23: #{tpu_custom_call.1} parent=1 // pred_check_branch
      %48 = sbr.rel (%p46) target = $region25
    $region24: #{tpu_custom_call.1} parent=1 // pred_region
      %vm49 = vcmask 257024
      %50 = vst.msk [vmem:[#allocation2] sm:$0xf] %vm49, 4286644096
    $region25: #{tpu_custom_call.1} parent=1 // pred_fallthru
      _
    %v51 = vld [vmem:[#allocation3] sm:$0xf]
    %v52 = vld [vmem:[#allocation3 + $0x4] sm:$0xf]
    %v53 = vld [vmem:[#allocation3 + $0x8] sm:$0xf]
    %v54 = vld [vmem:[#allocation3 + $0xc] sm:$0xf]
    %v55 = vld [vmem:[#allocation3 + $0x10] sm:$0xf]
    %v56 = vld [vmem:[#allocation3 + $0x14] sm:$0xf]
    %v57 = vld [vmem:[#allocation3 + $0x18] sm:$0xf]
    %v58 = vld [vmem:[#allocation3 + $0x1c] sm:$0xf]
    %v59 = vld [vmem:[#allocation3 + $0x20] sm:$0xf]
    %v60 = vld [vmem:[#allocation3 + $0x24] sm:$0xf]
    %v61 = vld [vmem:[#allocation3 + $0x28] sm:$0xf]
    %v62 = vld [vmem:[#allocation3 + $0x2c] sm:$0xf]
    %v63 = vld [vmem:[#allocation3 + $0x30] sm:$0xf]
    %v64 = vld [vmem:[#allocation3 + $0x34] sm:$0xf]
    %v65 = vld [vmem:[#allocation3 + $0x38] sm:$0xf]
    %v66 = vld [vmem:[#allocation3 + $0x3c] sm:$0xf]
    %v67 = vld [vmem:[#allocation3 + $0x40] sm:$0xf]
    %v68 = vld [vmem:[#allocation3 + $0x44] sm:$0xf]
    %v69 = vld [vmem:[#allocation3 + $0x48] sm:$0xf]
    %v70 = vld [vmem:[#allocation3 + $0x4c] sm:$0xf]
    %v71 = vld [vmem:[#allocation3 + $0x50] sm:$0xf]
    %v72 = vld [vmem:[#allocation3 + $0x54] sm:$0xf]
    %v73 = vld [vmem:[#allocation3 + $0x58] sm:$0xf]
    %v74 = vld [vmem:[#allocation3 + $0x5c] sm:$0xf]
    %v75 = vlaneseq
    %v76 = vshrl.u32 %v75, 7
    %v77 = vadd.s32 %v76, 8
    %v78 = vadd.s32 %v76, 16
    %s79 = smul.u32 0, 24
    %v80 = vstv %s79
    %v81 = vadd.s32 %v76, %v80
    %v82 = vadd.s32 %v77, %v80
    %v83 = vadd.s32 %v78, %v80
    %vm84 = vcmp.lt.s32.totalorder %v81, 20
    %vm85 = vcmp.lt.s32.totalorder %v82, 20
    %vm86 = vcmp.lt.s32.totalorder %v83, 20
    %v87 = vsel %vm84, 1, 0
    %v88 = vsel %vm85, 1, 0
    %v89 = vsel %vm86, 1, 0
    %vm90 = vcmp.eq.s32.totalorder %v87, 1
    %vm91 = vcmp.eq.s32.totalorder %v88, 1
    %vm92 = vcmp.eq.s32.totalorder %v89, 1
    %vm93 = vmpackc.low %vm90, %vm90
    %vm94 = vmpackc.low %vm91, %vm91
    %vm95 = vmpackc.low %vm92, %vm92
    %v96 = vsel %vm93, %v51, 4286644096
    %v97 = vsel %vm94, %v52, 4286644096
    %v98 = vsel %vm95, %v53, 4286644096
    %v99 = vsel %vm93, %v54, 4286644096
    %v100 = vsel %vm94, %v55, 4286644096
    %v101 = vsel %vm95, %v56, 4286644096
    %v102 = vsel %vm93, %v57, 4286644096
    %v103 = vsel %vm94, %v58, 4286644096
    %v104 = vsel %vm95, %v59, 4286644096
    %v105 = vsel %vm93, %v60, 4286644096
    %v106 = vsel %vm94, %v61, 4286644096
    %v107 = vsel %vm95, %v62, 4286644096
    %v108 = vsel %vm93, %v63, 4286644096
    %v109 = vsel %vm94, %v64, 4286644096
    %v110 = vsel %vm95, %v65, 4286644096
    %v111 = vsel %vm93, %v66, 4286644096
    %v112 = vsel %vm94, %v67, 4286644096
    %v113 = vsel %vm95, %v68, 4286644096
    %v114 = vsel %vm93, %v69, 4286644096
    %v115 = vsel %vm94, %v70, 4286644096
    %v116 = vsel %vm95, %v71, 4286644096
    %v117 = vsel %vm93, %v72, 4286644096
    %v118 = vsel %vm94, %v73, 4286644096
    %v119 = vsel %vm95, %v74, 4286644096
    %v120 = vld [vmem:[#allocation2] sm:$0xf]
    %v145 = vunpack.c.l.b16 %v96
    %v146 = vunpack.c.l.b16 %v97
    %v147 = vunpack.c.l.b16 %v98
    %v148 = vunpack.c.l.b16 %v99
    %v149 = vunpack.c.l.b16 %v100
    %v150 = vunpack.c.l.b16 %v101
    %v151 = vunpack.c.l.b16 %v102
    %v152 = vunpack.c.l.b16 %v103
    %v153 = vunpack.c.l.b16 %v104
    %v154 = vunpack.c.l.b16 %v105
    %v155 = vunpack.c.l.b16 %v106
    %v156 = vunpack.c.l.b16 %v107
    %v157 = vunpack.c.l.b16 %v108
    %v158 = vunpack.c.l.b16 %v109
    %v159 = vunpack.c.l.b16 %v110
    %v160 = vunpack.c.l.b16 %v111
    %v161 = vunpack.c.l.b16 %v112
    %v162 = vunpack.c.l.b16 %v113
    %v163 = vunpack.c.l.b16 %v114
    %v164 = vunpack.c.l.b16 %v115
    %v165 = vunpack.c.l.b16 %v116
    %v166 = vunpack.c.l.b16 %v117
    %v167 = vunpack.c.l.b16 %v118
    %v168 = vunpack.c.l.b16 %v119
    %v169 = vpack.c.b16 %v146, %v145
    %v170 = vpack.c.b16 %v147, %v147
    %v171 = vpack.c.b16 %v149, %v148
    %v172 = vpack.c.b16 %v150, %v150
    %v173 = vpack.c.b16 %v152, %v151
    %v174 = vpack.c.b16 %v153, %v153
    %v175 = vpack.c.b16 %v155, %v154
    %v176 = vpack.c.b16 %v156, %v156
    %v177 = vpack.c.b16 %v158, %v157
    %v178 = vpack.c.b16 %v159, %v159
    %v179 = vpack.c.b16 %v161, %v160
    %v180 = vpack.c.b16 %v162, %v162
    %v181 = vpack.c.b16 %v164, %v163
    %v182 = vpack.c.b16 %v165, %v165
    %v183 = vpack.c.b16 %v167, %v166
    %v184 = vpack.c.b16 %v168, %v168
    %vm185 = vcmask 261120
    %v188 = vsel %vm185, %v169, 4286644096
    %vm190 = vcmask 257024
    %v192 = vsel %vm190, %v170, 4286644096
    %v194 = vmax.bf16 %v188, %v192
    %v195 = vunpack.i.l.bf16 %v194
    %v196 = vunpack.i.h.bf16 %v194
    %v197 = vmax.f32 %v195, %v196
    %v198 = vrot.slane %v197, 4
    %v199 = vmax.f32 %v197, %v198
    %v200 = vrot.slane %v199, 2
    %v201 = vmax.f32 %v199, %v200
    %v202 = vrot.slane %v201, 1
    %v203 = vmax.f32 %v201, %v202
    %v204 = vpack.i.bf16 %v203, %v203
    %v206 = vsel %vm185, %v171, 4286644096
    %v209 = vsel %vm190, %v172, 4286644096
    %v211 = vmax.bf16 %v206, %v209
    %v212 = vunpack.i.l.bf16 %v211
    %v213 = vunpack.i.h.bf16 %v211
    %v214 = vmax.f32 %v212, %v213
    %v215 = vrot.slane %v214, 4
    %v216 = vmax.f32 %v214, %v215
    %v217 = vrot.slane %v216, 2
    %v218 = vmax.f32 %v216, %v217
    %v219 = vrot.slane %v218, 1
    %v220 = vmax.f32 %v218, %v219
    %v221 = vpack.i.bf16 %v220, %v220
    %v223 = vsel %vm185, %v173, 4286644096
    %v226 = vsel %vm190, %v174, 4286644096
    %v228 = vmax.bf16 %v223, %v226
    %v229 = vunpack.i.l.bf16 %v228
    %v230 = vunpack.i.h.bf16 %v228
    %v231 = vmax.f32 %v229, %v230
    %v232 = vrot.slane %v231, 4
    %v233 = vmax.f32 %v231, %v232
    %v234 = vrot.slane %v233, 2
    %v235 = vmax.f32 %v233, %v234
    %v236 = vrot.slane %v235, 1
    %v237 = vmax.f32 %v235, %v236
    %v238 = vpack.i.bf16 %v237, %v237
    %v240 = vsel %vm185, %v175, 4286644096
    %v243 = vsel %vm190, %v176, 4286644096
    %v245 = vmax.bf16 %v240, %v243
    %v246 = vunpack.i.l.bf16 %v245
    %v247 = vunpack.i.h.bf16 %v245
    %v248 = vmax.f32 %v246, %v247
    %v249 = vrot.slane %v248, 4
    %v250 = vmax.f32 %v248, %v249
    %v251 = vrot.slane %v250, 2
    %v252 = vmax.f32 %v250, %v251
    %v253 = vrot.slane %v252, 1
    %v254 = vmax.f32 %v252, %v253
    %v255 = vpack.i.bf16 %v254, %v254
    %v257 = vsel %vm185, %v177, 4286644096
    %v260 = vsel %vm190, %v178, 4286644096
    %v262 = vmax.bf16 %v257, %v260
    %v263 = vunpack.i.l.bf16 %v262
    %v264 = vunpack.i.h.bf16 %v262
    %v265 = vmax.f32 %v263, %v264
    %v266 = vrot.slane %v265, 4
    %v267 = vmax.f32 %v265, %v266
    %v268 = vrot.slane %v267, 2
    %v269 = vmax.f32 %v267, %v268
    %v270 = vrot.slane %v269, 1
    %v271 = vmax.f32 %v269, %v270
    %v272 = vpack.i.bf16 %v271, %v271
    %v274 = vsel %vm185, %v179, 4286644096
    %v277 = vsel %vm190, %v180, 4286644096
    %v279 = vmax.bf16 %v274, %v277
    %v280 = vunpack.i.l.bf16 %v279
    %v281 = vunpack.i.h.bf16 %v279
    %v282 = vmax.f32 %v280, %v281
    %v283 = vrot.slane %v282, 4
    %v284 = vmax.f32 %v282, %v283
    %v285 = vrot.slane %v284, 2
    %v286 = vmax.f32 %v284, %v285
    %v287 = vrot.slane %v286, 1
    %v288 = vmax.f32 %v286, %v287
    %v289 = vpack.i.bf16 %v288, %v288
    %v291 = vsel %vm185, %v181, 4286644096
    %v294 = vsel %vm190, %v182, 4286644096
    %v296 = vmax.bf16 %v291, %v294
    %v297 = vunpack.i.l.bf16 %v296
    %v298 = vunpack.i.h.bf16 %v296
    %v299 = vmax.f32 %v297, %v298
    %v300 = vrot.slane %v299, 4
    %v301 = vmax.f32 %v299, %v300
    %v302 = vrot.slane %v301, 2
    %v303 = vmax.f32 %v301, %v302
    %v304 = vrot.slane %v303, 1
    %v305 = vmax.f32 %v303, %v304
    %v306 = vpack.i.bf16 %v305, %v305
    %v308 = vsel %vm185, %v183, 4286644096
    %v311 = vsel %vm190, %v184, 4286644096
    %v313 = vmax.bf16 %v308, %v311
    %v314 = vunpack.i.l.bf16 %v313
    %v315 = vunpack.i.h.bf16 %v313
    %v316 = vmax.f32 %v314, %v315
    %v317 = vrot.slane %v316, 4
    %v318 = vmax.f32 %v316, %v317
    %v319 = vrot.slane %v318, 2
    %v320 = vmax.f32 %v318, %v319
    %v321 = vrot.slane %v320, 1
    %v322 = vmax.f32 %v320, %v321
    %v323 = vpack.i.bf16 %v322, %v322
    %v332 = vunpack.c.l.b16 %v204
    %v333 = vunpack.c.l.b16 %v221
    %v334 = vunpack.c.l.b16 %v238
    %v335 = vunpack.c.l.b16 %v255
    %v336 = vunpack.c.l.b16 %v272
    %v337 = vunpack.c.l.b16 %v289
    %v338 = vunpack.c.l.b16 %v306
    %v339 = vunpack.c.l.b16 %v323
    %v340 = vpack.c.b16 %v332, %v332
    %v341 = vpack.c.b16 %v333, %v333
    %v342 = vpack.c.b16 %v334, %v334
    %v343 = vpack.c.b16 %v335, %v335
    %v344 = vpack.c.b16 %v336, %v336
    %v345 = vpack.c.b16 %v337, %v337
    %v346 = vpack.c.b16 %v338, %v338
    %v347 = vpack.c.b16 %v339, %v339
    %v348 = vunpack.c.l.b16 %v340
    %v349 = vunpack.c.l.b16 %v341
    %v350 = vunpack.c.l.b16 %v342
    %v351 = vunpack.c.l.b16 %v343
    %v352 = vunpack.c.l.b16 %v344
    %v353 = vunpack.c.l.b16 %v345
    %v354 = vunpack.c.l.b16 %v346
    %v355 = vunpack.c.l.b16 %v347
    %vm356 = vcmask 1041409
    %v357 = vsel %vm356, %v349, %v348
    %vm358 = vcmask 1042434
    %v359 = vsel %vm358, %v350, %v357
    %vm360 = vcmask 1043459
    %v361 = vsel %vm360, %v351, %v359
    %vm362 = vcmask 1044484
    %v363 = vsel %vm362, %v352, %v361
    %vm364 = vcmask 1045509
    %v365 = vsel %vm364, %v353, %v363
    %vm366 = vcmask 1046534
    %v367 = vsel %vm366, %v354, %v365
    %vm368 = vcmask 1047559
    %v369 = vsel %vm368, %v355, %v367
    %v370 = vpack.c.b16 %v369, %v369
    %v372 = vmax.bf16 %v120, %v370
    %373 = vst.msk [vmem:[#allocation2] sm:$0xf] %vm190, %v372
    // Predicated region
    $region26: #{tpu_custom_call.1} parent=1 // pred_check
      %p374 = pneg %p45
    $region27: #{tpu_custom_call.1} parent=1 // pred_check_branch
      %376 = sbr.rel (%p374) target = $region29
    $region28: #{tpu_custom_call.1} parent=1 // pred_region
      %v377 = vld [vmem:[#allocation2] sm:$0xf]
      %v378 = vld [vmem:[#allocation6] sm:$0xf]
      %v379 = vld [vmem:[#allocation6 + $0x4] sm:$0xf]
      %v380 = vld [vmem:[#allocation6 + $0x8] sm:$0xf]
      %v381 = vld [vmem:[#allocation6 + $0xc] sm:$0xf]
      %v382 = vld [vmem:[%s2] sm:$0x1]
      %v384 = vlaneseq
      %v385 = vshrl.u32 %v384, 7
      %v386 = vsub.s32 0, %v385
      %v387 = vrot.slane %v382, %v386
      %v393 = vunpack.c.l.b16 %v378
      %v394 = vunpack.c.l.b16 %v379
      %v395 = vunpack.c.l.b16 %v380
      %v396 = vunpack.c.l.b16 %v381
      %v397 = vpack.c.b16 %v394, %v393
      %v398 = vpack.c.b16 %v396, %v395
      %v402 = vsel %vm185, %v377, 0
      %404 = vmatprep.subr.bf16.mxu0 0
      %405 = vmatpush1.bf16.msra.mxu0 0
      %406 = vmatprep.subr.bf16.mxu0 0
      %407 = vmatpush1.bf16.msra.mxu0 0
      %408 = vmatprep.subr.bf16.mxu0 0
      %409 = vmatpush1.bf16.msra.mxu0 0
      %410 = vmatprep.subr.bf16.mxu0 0
      %411 = vmatpush1.bf16.msra.mxu0 0
      %412 = vmatprep.subr.bf16.mxu0 0
      %413 = vmatpush1.bf16.msra.mxu0 0
      %414 = vmatprep.subr.bf16.mxu0 0
      %415 = vmatpush1.bf16.msra.mxu0 0
      %416 = vmatprep.subr.bf16.mxu0 0
      %417 = vmatpush1.bf16.msra.mxu0 %v398
      %418 = vmatprep.subr.bf16.mxu0 0
      %419 = vmatpush1.bf16.msra.mxu0 %v397
      %420 = vmatprep.subr.bf16.mxu0 0
      %421 = vmatpush2.bf16.msra.mxu0 0
      %422 = vmatprep.subr.bf16.mxu0 0
      %423 = vmatpush2.bf16.msra.mxu0 0
      %424 = vmatprep.subr.bf16.mxu0 0
      %425 = vmatpush2.bf16.msra.mxu0 0
      %426 = vmatprep.subr.bf16.mxu0 0
      %427 = vmatpush2.bf16.msra.mxu0 0
      %428 = vmatprep.subr.bf16.mxu0 0
      %429 = vmatpush2.bf16.msra.mxu0 0
      %430 = vmatprep.subr.bf16.mxu0 0
      %431 = vmatpush2.bf16.msra.mxu0 0
      %432 = vmatprep.subr.bf16.mxu0 0
      %433 = vmatpush2.bf16.msra.mxu0 0
      %434 = vmatprep.subr.bf16.mxu0 0
      %435 = vmatpush2.bf16.msra.mxu0 0
      %436 = vmatprep.mubr.bf16.mxu0 0
      %437 = vmatmul.mubr.bf16.gmra.mxu0 %v402
      %v438 = vpop.f32.mrf.mxu0
      %v439 = vadd.f32 %v387, %v438
      %v440 = vpop.f32.mrf.mxu0
      %v441 = vpop.f32.mrf.mxu0
      %v442 = vpop.f32.mrf.mxu0
      %443 = vdwg.mxu0
      %v444 = vpack.c.bf16 %v439, %v439
      %445 = vst [vmem:[#allocation8] sm:$0xf] %v444
    $region29: #{tpu_custom_call.1} parent=1 // pred_fallthru
      _
    // Predicated region
    $region30: #{tpu_custom_call.1} parent=1 // pred_check
      _
    $region31: #{tpu_custom_call.1} parent=1 // pred_check_branch
      %447 = sbr.rel (0) target = $region33
    $region32: #{tpu_custom_call.1} parent=1 // pred_region
      %s449 = ssub.s32 64, 64
      %450 = vsyncadd [#allocation5], %s449
      %s452 = sshll.u32 [#allocation8], 4
      %s453 = int_to_ptr.vmem [resolvable:$true] %s452
      %455 = dma.vmem_to_hbm [thread:$0]  %s453, 64, %s3, [#allocation5]
    $region33: #{tpu_custom_call.1} parent=1 // pred_fallthru
      _
    // Predicated region
    $region34: #{tpu_custom_call.1} parent=1 // pred_check
      _
    $region35: #{tpu_custom_call.1} parent=1 // pred_check_branch
      %457 = sbr.rel (0) target = $region37
    $region36: #{tpu_custom_call.1} parent=1 // pred_region
      %458 = dma.done [#allocation5], 64
    $region37: #{tpu_custom_call.1} parent=1 // pred_fallthru
      _
    %459 = vsyncpa [#allocation4], 1
    %460 = vsyncpa [#allocation7], 1
    %461 = vsyncpa [#allocation5], 1

</llo_original>
